<compile_context>
chip_gen: v5e
topology: v5e:2x2
jax: 0.10.0
libtpu: 0.0.40
codegen_flags: <defaults>
</compile_context>

<pallas_src>
import jax
import jax.numpy as jnp
from jax.experimental import pallas as pl
from jax.experimental.pallas import tpu as pltpu

STATE_SIZE = 37
HIDDEN1 = 150
HIDDEN2 = 120
ACTION_SIZE = 4
BN_EPS = 1e-5

# Padded (lane / sublane aligned) dims used inside the kernel.
SP_PAD = 40      # state dim 37 -> 40 (sublane-aligned contraction dim)
H1P = 256        # hidden1 150 -> 256 lanes
H2P = 128        # hidden2 120 -> 128 lanes
OUT_PAD = 128    # action dim 4 -> 128 lanes (lane-dense output store)

# Slab A (width H1P = 256): rows [0:40) = w1, row 40 = gamma1, row 41 = beta1.
ROW_G1 = SP_PAD
ROW_B1 = SP_PAD + 1
A_ROWS = 48                       # padded to a multiple of 8 sublanes

# Slab B (width H2P = 128): rows [0:256) = w2, 256 = gamma2, 257 = beta2,
# rows [264:392) = w3, row 392 = bias3.
ROW_G2 = H1P
ROW_B2 = H1P + 1
ROW_W3 = H1P + 8                  # 264, 8-aligned start for the w3 block
ROW_B3 = ROW_W3 + H2P             # 392
B_ROWS = 400                      # padded to a multiple of 8 sublanes


def _qnetwork_kernel(x_ref, a_ref, b_ref, o_ref):
    B = x_ref.shape[0]            # static at trace time
    inv_b = 1.0 / float(B)

    x = x_ref[...]                                   # (B, 40) f32, zero-padded cols

    # ---- fc1 (no bias) + fused bn1 (batch stats) + relu ----
    w1 = a_ref[0:SP_PAD, :]                          # (40, 256)
    g1 = a_ref[ROW_G1:ROW_G1 + 1, :]                 # (1, 256)
    b1 = a_ref[ROW_B1:ROW_B1 + 1, :]                 # (1, 256)

    h1 = jnp.dot(x, w1, preferred_element_type=jnp.float32)      # (B, 256)
    s1 = jnp.sum(h1, axis=0, keepdims=True)                      # (1, 256)
    q1 = jnp.sum(h1 * h1, axis=0, keepdims=True)                 # (1, 256)
    m1 = s1 * inv_b
    v1 = q1 * inv_b - m1 * m1                                    # biased variance
    scale1 = g1 * jax.lax.rsqrt(v1 + BN_EPS)
    shift1 = b1 - m1 * scale1
    h1 = jnp.maximum(h1 * scale1 + shift1, 0.0)                  # padded lanes stay 0

    # ---- fc2 (no bias) + fused bn2 (batch stats) + relu ----
    w2 = b_ref[0:H1P, :]                             # (256, 128)
    g2 = b_ref[ROW_G2:ROW_G2 + 1, :]                 # (1, 128)
    b2 = b_ref[ROW_B2:ROW_B2 + 1, :]                 # (1, 128)

    h2 = jnp.dot(h1, w2, preferred_element_type=jnp.float32)     # (B, 128)
    s2 = jnp.sum(h2, axis=0, keepdims=True)
    q2 = jnp.sum(h2 * h2, axis=0, keepdims=True)
    m2 = s2 * inv_b
    v2 = q2 * inv_b - m2 * m2
    scale2 = g2 * jax.lax.rsqrt(v2 + BN_EPS)
    shift2 = b2 - m2 * scale2
    h2 = jnp.maximum(h2 * scale2 + shift2, 0.0)                  # padded lanes stay 0

    # ---- fc3 (with bias), lane-dense (B, 128) store ----
    w3 = b_ref[ROW_W3:ROW_W3 + H2P, :]               # (128, 128)
    b3 = b_ref[ROW_B3:ROW_B3 + 1, :]                 # (1, 128)
    o_ref[...] = jnp.dot(h2, w3, preferred_element_type=jnp.float32) + b3


def _full(shape):
    return pl.BlockSpec(shape, lambda: (0,) * len(shape))


def pack_params(p):
    """Pack the 8 parameter tensors into two lane-aligned f32 slabs."""
    slab_a = jnp.zeros((A_ROWS, H1P), jnp.float32)
    slab_a = slab_a.at[:STATE_SIZE, :HIDDEN1].set(p["w1"])
    slab_a = slab_a.at[ROW_G1, :HIDDEN1].set(p["g1"].reshape(-1))
    slab_a = slab_a.at[ROW_B1, :HIDDEN1].set(p["b1"].reshape(-1))

    slab_b = jnp.zeros((B_ROWS, H2P), jnp.float32)
    slab_b = slab_b.at[:HIDDEN1, :HIDDEN2].set(p["w2"])
    slab_b = slab_b.at[ROW_G2, :HIDDEN2].set(p["g2"].reshape(-1))
    slab_b = slab_b.at[ROW_B2, :HIDDEN2].set(p["b2"].reshape(-1))
    slab_b = slab_b.at[ROW_W3:ROW_W3 + HIDDEN2, :ACTION_SIZE].set(p["w3"])
    slab_b = slab_b.at[ROW_B3, :ACTION_SIZE].set(p["b3"].reshape(-1))
    return slab_a, slab_b


def qnetwork_forward(x, slab_a, slab_b):
    """x: (B, STATE_SIZE) f32; slabs from pack_params. Returns (B, ACTION_SIZE)."""
    B = x.shape[0]
    # Zero-pad the feature dim 37 -> 40 (layout plumbing only; batch is NOT
    # padded so BatchNorm statistics remain exact).
    xp = jnp.zeros((B, SP_PAD), jnp.float32).at[:, :STATE_SIZE].set(x)

    out = pl.pallas_call(
        _qnetwork_kernel,
        out_shape=jax.ShapeDtypeStruct((B, OUT_PAD), jnp.float32),
        grid=(),
        in_specs=[
            _full((B, SP_PAD)),
            _full((A_ROWS, H1P)),
            _full((B_ROWS, H2P)),
        ],
        out_specs=_full((B, OUT_PAD)),
        compiler_params=pltpu.CompilerParams(vmem_limit_bytes=32 * 1024 * 1024),
    )(xp, slab_a, slab_b)
    return out[:, :ACTION_SIZE]


def init_params(key):
    """Deterministic synthetic params matching the PyTorch module's shapes.

    nn.Linear default init: U(-1/sqrt(fan_in), 1/sqrt(fan_in)).
    BatchNorm1d default init: gamma=1, beta=0.
    Weights stored as (in, out) for x @ W (transpose of torch's (out, in)).
    """
    k1, k2, k3, k4 = jax.random.split(key, 4)

    def lin(k, fan_in, fan_out):
        bound = 1.0 / jnp.sqrt(float(fan_in))
        return jax.random.uniform(k, (fan_in, fan_out), jnp.float32, -bound, bound)

    bound3 = 1.0 / jnp.sqrt(float(HIDDEN2))
    return {
        "w1": lin(k1, STATE_SIZE, HIDDEN1),
        "g1": jnp.ones((1, HIDDEN1), jnp.float32),
        "b1": jnp.zeros((1, HIDDEN1), jnp.float32),
        "w2": lin(k2, HIDDEN1, HIDDEN2),
        "g2": jnp.ones((1, HIDDEN2), jnp.float32),
        "b2": jnp.zeros((1, HIDDEN2), jnp.float32),
        "w3": lin(k3, HIDDEN2, ACTION_SIZE),
        "b3": jax.random.uniform(k4, (1, ACTION_SIZE), jnp.float32, -bound3, bound3),
    }


def _reference_forward(x, p):
    """Pure-JAX reference (two-pass BN stats) for correctness check."""
    h1 = x @ p["w1"]
    m1 = h1.mean(0, keepdims=True)
    v1 = ((h1 - m1) ** 2).mean(0, keepdims=True)
    h1 = jnp.maximum((h1 - m1) / jnp.sqrt(v1 + BN_EPS) * p["g1"] + p["b1"], 0.0)
    h2 = h1 @ p["w2"]
    m2 = h2.mean(0, keepdims=True)
    v2 = ((h2 - m2) ** 2).mean(0, keepdims=True)
    h2 = jnp.maximum((h2 - m2) / jnp.sqrt(v2 + BN_EPS) * p["g2"] + p["b2"], 0.0)
    return h2 @ p["w3"] + p["b3"]


if __name__ == "__main__":
    key = jax.random.PRNGKey(0)
    pkey, xkey = jax.random.split(key)

    params = init_params(pkey)
    slab_a, slab_b = pack_params(params)

    batch = 8  # BatchNorm1d training-mode stats need batch > 1
    x = jax.random.normal(xkey, (batch, STATE_SIZE), jnp.float32)

    out = qnetwork_forward(x, slab_a, slab_b)
    out = jax.block_until_ready(out)

    ref = _reference_forward(x, params)
    assert out.shape == (batch, ACTION_SIZE)
    assert jnp.allclose(out, ref, atol=1e-4, rtol=1e-4), "mismatch vs reference"

    print("KERNEL_OK")
</pallas_src>

<mosaic_0001>
module attributes {stable_mosaic.version = 11 : i64} {
  func.func @_qnetwork_kernel(%arg0: memref<8x40xf32, #tpu.memory_space<vmem>>, %arg1: memref<48x256xf32, #tpu.memory_space<vmem>>, %arg2: memref<400x128xf32, #tpu.memory_space<vmem>>, %arg3: memref<8x128xf32, #tpu.memory_space<vmem>>) attributes {dimension_semantics = [], scalar_prefetch = 0 : i64, scratch_operands = 0 : i64, tpu.core_type = #tpu.core_type<tc>} {
    %c0 = arith.constant 0 : index
    %c0_0 = arith.constant 0 : index
    %0 = vector.load %arg0[%c0, %c0_0] : memref<8x40xf32, #tpu.memory_space<vmem>>, vector<8x40xf32>
    %c0_1 = arith.constant 0 : index
    %c0_2 = arith.constant 0 : index
    %1 = vector.load %arg1[%c0_1, %c0_2] : memref<48x256xf32, #tpu.memory_space<vmem>>, vector<40x256xf32>
    %c40 = arith.constant 40 : index
    %c0_3 = arith.constant 0 : index
    %2 = vector.load %arg1[%c40, %c0_3] : memref<48x256xf32, #tpu.memory_space<vmem>>, vector<1x256xf32>
    %c41 = arith.constant 41 : index
    %c0_4 = arith.constant 0 : index
    %3 = vector.load %arg1[%c41, %c0_4] : memref<48x256xf32, #tpu.memory_space<vmem>>, vector<1x256xf32>
    %cst = arith.constant dense<0.000000e+00> : vector<8x256xf32>
    %4 = tpu.matmul %0, %1, %cst {dimension_numbers = #tpu.dot_dimension_numbers<[1], [0], [0], [1], [0, 0, 1, 1], [], []>} : vector<8x40xf32>, vector<40x256xf32>, vector<8x256xf32> -> vector<8x256xf32>
    %cst_5 = arith.constant dense<0.000000e+00> : vector<256xf32>
    %5 = vector.multi_reduction <add>, %4, %cst_5 [0] : vector<8x256xf32> to vector<256xf32>
    %6 = vector.shape_cast %5 : vector<256xf32> to vector<1x256xf32>
    %7 = arith.mulf %4, %4 : vector<8x256xf32>
    %cst_6 = arith.constant dense<0.000000e+00> : vector<256xf32>
    %8 = vector.multi_reduction <add>, %7, %cst_6 [0] : vector<8x256xf32> to vector<256xf32>
    %9 = vector.shape_cast %8 : vector<256xf32> to vector<1x256xf32>
    %cst_7 = arith.constant 1.250000e-01 : f32
    %10 = vector.broadcast %cst_7 : f32 to vector<1x256xf32>
    %11 = arith.mulf %6, %10 : vector<1x256xf32>
    %cst_8 = arith.constant 1.250000e-01 : f32
    %12 = vector.broadcast %cst_8 : f32 to vector<1x256xf32>
    %13 = arith.mulf %9, %12 : vector<1x256xf32>
    %14 = arith.mulf %11, %11 : vector<1x256xf32>
    %15 = arith.subf %13, %14 : vector<1x256xf32>
    %cst_9 = arith.constant 9.99999974E-6 : f32
    %16 = vector.broadcast %cst_9 : f32 to vector<1x256xf32>
    %17 = arith.addf %15, %16 : vector<1x256xf32>
    %18 = math.rsqrt %17 : vector<1x256xf32>
    %19 = arith.mulf %2, %18 : vector<1x256xf32>
    %20 = arith.mulf %11, %19 : vector<1x256xf32>
    %21 = arith.subf %3, %20 : vector<1x256xf32>
    %22 = vector.broadcast %19 : vector<1x256xf32> to vector<8x256xf32>
    %23 = arith.mulf %4, %22 : vector<8x256xf32>
    %24 = vector.broadcast %21 : vector<1x256xf32> to vector<8x256xf32>
    %25 = arith.addf %23, %24 : vector<8x256xf32>
    %cst_10 = arith.constant 0.000000e+00 : f32
    %26 = vector.broadcast %cst_10 : f32 to vector<8x256xf32>
    %27 = arith.maximumf %25, %26 : vector<8x256xf32>
    %c0_11 = arith.constant 0 : index
    %c0_12 = arith.constant 0 : index
    %28 = vector.load %arg2[%c0_11, %c0_12] : memref<400x128xf32, #tpu.memory_space<vmem>>, vector<256x128xf32>
    %c256 = arith.constant 256 : index
    %c0_13 = arith.constant 0 : index
    %29 = vector.load %arg2[%c256, %c0_13] : memref<400x128xf32, #tpu.memory_space<vmem>>, vector<1x128xf32>
    %c257 = arith.constant 257 : index
    %c0_14 = arith.constant 0 : index
    %30 = vector.load %arg2[%c257, %c0_14] : memref<400x128xf32, #tpu.memory_space<vmem>>, vector<1x128xf32>
    %cst_15 = arith.constant dense<0.000000e+00> : vector<8x128xf32>
    %31 = tpu.matmul %27, %28, %cst_15 {dimension_numbers = #tpu.dot_dimension_numbers<[1], [0], [0], [1], [0, 0, 1, 1], [], []>} : vector<8x256xf32>, vector<256x128xf32>, vector<8x128xf32> -> vector<8x128xf32>
    %cst_16 = arith.constant dense<0.000000e+00> : vector<128xf32>
    %32 = vector.multi_reduction <add>, %31, %cst_16 [0] : vector<8x128xf32> to vector<128xf32>
    %33 = vector.shape_cast %32 : vector<128xf32> to vector<1x128xf32>
    %34 = arith.mulf %31, %31 : vector<8x128xf32>
    %cst_17 = arith.constant dense<0.000000e+00> : vector<128xf32>
    %35 = vector.multi_reduction <add>, %34, %cst_17 [0] : vector<8x128xf32> to vector<128xf32>
    %36 = vector.shape_cast %35 : vector<128xf32> to vector<1x128xf32>
    %cst_18 = arith.constant 1.250000e-01 : f32
    %37 = vector.broadcast %cst_18 : f32 to vector<1x128xf32>
    %38 = arith.mulf %33, %37 : vector<1x128xf32>
    %cst_19 = arith.constant 1.250000e-01 : f32
    %39 = vector.broadcast %cst_19 : f32 to vector<1x128xf32>
    %40 = arith.mulf %36, %39 : vector<1x128xf32>
    %41 = arith.mulf %38, %38 : vector<1x128xf32>
    %42 = arith.subf %40, %41 : vector<1x128xf32>
    %cst_20 = arith.constant 9.99999974E-6 : f32
    %43 = vector.broadcast %cst_20 : f32 to vector<1x128xf32>
    %44 = arith.addf %42, %43 : vector<1x128xf32>
    %45 = math.rsqrt %44 : vector<1x128xf32>
    %46 = arith.mulf %29, %45 : vector<1x128xf32>
    %47 = arith.mulf %38, %46 : vector<1x128xf32>
    %48 = arith.subf %30, %47 : vector<1x128xf32>
    %49 = vector.broadcast %46 : vector<1x128xf32> to vector<8x128xf32>
    %50 = arith.mulf %31, %49 : vector<8x128xf32>
    %51 = vector.broadcast %48 : vector<1x128xf32> to vector<8x128xf32>
    %52 = arith.addf %50, %51 : vector<8x128xf32>
    %cst_21 = arith.constant 0.000000e+00 : f32
    %53 = vector.broadcast %cst_21 : f32 to vector<8x128xf32>
    %54 = arith.maximumf %52, %53 : vector<8x128xf32>
    %c264 = arith.constant 264 : index
    %c0_22 = arith.constant 0 : index
    %55 = vector.load %arg2[%c264, %c0_22] : memref<400x128xf32, #tpu.memory_space<vmem>>, vector<128x128xf32>
    %c392 = arith.constant 392 : index
    %c0_23 = arith.constant 0 : index
    %56 = vector.load %arg2[%c392, %c0_23] : memref<400x128xf32, #tpu.memory_space<vmem>>, vector<1x128xf32>
    %cst_24 = arith.constant dense<0.000000e+00> : vector<8x128xf32>
    %57 = tpu.matmul %54, %55, %cst_24 {dimension_numbers = #tpu.dot_dimension_numbers<[1], [0], [0], [1], [0, 0, 1, 1], [], []>} : vector<8x128xf32>, vector<128x128xf32>, vector<8x128xf32> -> vector<8x128xf32>
    %58 = vector.broadcast %56 : vector<1x128xf32> to vector<8x128xf32>
    %59 = arith.addf %57, %58 : vector<8x128xf32>
    %c0_25 = arith.constant 0 : index
    %c0_26 = arith.constant 0 : index
    %60 = vector.load %arg3[%c0_25, %c0_26] : memref<8x128xf32, #tpu.memory_space<vmem>>, vector<8x128xf32>
    tpu.vector_store %arg3[%c0_25, %c0_26], %59 {strides = array<i32>} : memref<8x128xf32, #tpu.memory_space<vmem>>, vector<8x128xf32>,
    return
  }
}

</mosaic_0001>

<llo_original>
// kernel: tpu_custom_call.1
$region0: #{tpu_custom_call.1}
  #allocation0 [shape = 'u32[]', space=smem, size = 0x4, offset = 0x4, fixed_abs, tag = 'smem constant byte address 0x4 - core index']
  #allocation1 [shape = 'u32[72,128]{1,0:T(1,128)}', space=vmem, size = 0x9000, scoped, tag = 'internal scratch']
  %s0 = inlined_call_operand.hbm [shape: f32[8,40], index: 0, kind: input, shape index: {}]
  %s1 = inlined_call_operand.hbm [shape: f32[48,256], index: 1, kind: input, shape index: {}]
  %s2 = inlined_call_operand.hbm [shape: f32[400,128], index: 2, kind: input, shape index: {}]
  %s3 = inlined_call_operand.hbm [shape: f32[8,128], index: 3, kind: output, shape index: {}]
  %s4 = sld [smem:[#allocation0]]
  $region34: #{tpu_custom_call.1} parent=0
    _
  %s6 = ssub.s32 1, %s4
  %s7 = scalar_select 0, %s6, %s4
  $region1: #{tpu_custom_call.1} parent=0
    #allocation2 [shape = 'u8[4096]{0}', space=vmem, size = 0x1000, scoped, tag = 'input window, operand 0, single buffered']
    #allocation3 [shape = 's32[1]{0}', space=sflag, size = 0x4, scoped, tag = 'scoped memory for tpu_custom_call.1']
    #allocation4 [shape = 's32[1]{0}', space=sflag, size = 0x4, scoped, tag = 'scoped memory for tpu_custom_call.1']
    #allocation5 [shape = 'u8[49152]{0}', space=vmem, size = 0xc000, scoped, tag = 'input window, operand 1, single buffered']
    #allocation6 [shape = 's32[1]{0}', space=sflag, size = 0x4, scoped, tag = 'scoped memory for tpu_custom_call.1']
    #allocation7 [shape = 'u8[204800]{0}', space=vmem, size = 0x32000, scoped, tag = 'input window, operand 2, single buffered']
    #allocation8 [shape = 'u8[4096]{0}', space=vmem, size = 0x1000, scoped, tag = 'output window, operand 0, single buffered']
    %8 = vsyncpa [#allocation3], 0
    %9 = vsyncpa [#allocation6], 0
    %10 = vsyncpa [#allocation4], 0
    // Predicated region
    $region2: #{tpu_custom_call.1} parent=1 // pred_check
      _
    $region3: #{tpu_custom_call.1} parent=1 // pred_check_branch
      %12 = sbr.rel (0) target = $region5
    $region4: #{tpu_custom_call.1} parent=1 // pred_region
      %14 = vsyncadd [#allocation3], 0
      %s16 = sshll.u32 %s0, 4
      %s17 = int_to_ptr.hbm [resolvable:$true] %s16
      %s18 = sshll.u32 [#allocation2], 4
      %s19 = int_to_ptr.vmem [resolvable:$true] %s18
      %21 = dma.hbm_to_vmem [thread:$0]  %s17, 128, %s19, [#allocation3]
    $region5: #{tpu_custom_call.1} parent=1 // pred_fallthru
      _
    // Predicated region
    $region6: #{tpu_custom_call.1} parent=1 // pred_check
      _
    $region7: #{tpu_custom_call.1} parent=1 // pred_check_branch
      %23 = sbr.rel (0) target = $region9
    $region8: #{tpu_custom_call.1} parent=1 // pred_region
      %25 = vsyncadd [#allocation6], 0
      %s26 = sshll.u32 %s1, 4
      %s27 = int_to_ptr.hbm [resolvable:$true] %s26
      %s28 = sshll.u32 [#allocation5], 4
      %s29 = int_to_ptr.vmem [resolvable:$true] %s28
      %34 = dma.hbm_to_vmem [thread:$0]  %s27, 1536, %s29, [#allocation6], 256, 256, 16
    $region9: #{tpu_custom_call.1} parent=1 // pred_fallthru
      _
    // Predicated region
    $region10: #{tpu_custom_call.1} parent=1 // pred_check
      _
    $region11: #{tpu_custom_call.1} parent=1 // pred_check_branch
      %36 = sbr.rel (0) target = $region13
    $region12: #{tpu_custom_call.1} parent=1 // pred_region
      %38 = vsyncadd [#allocation6], 0
      %s39 = sshll.u32 %s2, 4
      %s40 = int_to_ptr.hbm [resolvable:$true] %s39
      %s41 = sshll.u32 [#allocation7], 4
      %s42 = int_to_ptr.vmem [resolvable:$true] %s41
      %47 = dma.hbm_to_vmem [thread:$0]  %s40, 6400, %s42, [#allocation6], 128, 128, 8
    $region13: #{tpu_custom_call.1} parent=1 // pred_fallthru
      _
    // Predicated region
    $region14: #{tpu_custom_call.1} parent=1 // pred_check
      _
    $region15: #{tpu_custom_call.1} parent=1 // pred_check_branch
      %49 = sbr.rel (0) target = $region17
    $region16: #{tpu_custom_call.1} parent=1 // pred_region
      %51 = dma.done [#allocation3], 128
    $region17: #{tpu_custom_call.1} parent=1 // pred_fallthru
      _
    // Predicated region
    $region18: #{tpu_custom_call.1} parent=1 // pred_check
      _
    $region19: #{tpu_custom_call.1} parent=1 // pred_check_branch
      %53 = sbr.rel (0) target = $region21
    $region20: #{tpu_custom_call.1} parent=1 // pred_region
      %55 = dma.done [#allocation6], 1536
    $region21: #{tpu_custom_call.1} parent=1 // pred_fallthru
      _
    // Predicated region
    $region22: #{tpu_custom_call.1} parent=1 // pred_check
      _
    $region23: #{tpu_custom_call.1} parent=1 // pred_check_branch
      %57 = sbr.rel (0) target = $region25
    $region24: #{tpu_custom_call.1} parent=1 // pred_region
      %59 = dma.done [#allocation6], 6400
    $region25: #{tpu_custom_call.1} parent=1 // pred_fallthru
      _
    %v60 = vld [vmem:[#allocation2] sm:$0xff]
    %v61 = vld [vmem:[#allocation5] sm:$0xff]
    %v62 = vld [vmem:[#allocation5 + $0x8] sm:$0xff]
    %v63 = vld [vmem:[#allocation5 + $0x10] sm:$0xff]
    %v64 = vld [vmem:[#allocation5 + $0x18] sm:$0xff]
    %v65 = vld [vmem:[#allocation5 + $0x20] sm:$0xff]
    %v66 = vld [vmem:[#allocation5 + $0x28] sm:$0xff]
    %v67 = vld [vmem:[#allocation5 + $0x30] sm:$0xff]
    %v68 = vld [vmem:[#allocation5 + $0x38] sm:$0xff]
    %v69 = vld [vmem:[#allocation5 + $0x40] sm:$0xff]
    %v70 = vld [vmem:[#allocation5 + $0x48] sm:$0xff]
    %s71 = scalar_lea.vmem [#allocation5], 80
    %v72 = vld [vmem:[%s71] ss:$8 sm:$0x3]
    %s73 = scalar_lea.vmem [#allocation5], 81
    %v74 = vld [vmem:[%s73] ss:$8 sm:$0x3]
    %vm75 = vcmask 326656
    %v77 = vsel %vm75, %v60, 0
    %79 = vmatpush.msra.mxu0 0.0
    %80 = vmatpush.msra.mxu0 0.0
    %81 = vmatpush.msra.mxu0 0.0
    %82 = vmatpush.msra.mxu0 0.0
    %83 = vmatpush.msra.mxu0 0.0
    %84 = vmatpush.msra.mxu0 0.0
    %85 = vmatpush.msra.mxu0 0.0
    %86 = vmatpush.msra.mxu0 0.0
    %87 = vmatpush.msra.mxu0 0.0
    %88 = vmatpush.msra.mxu0 0.0
    %89 = vmatpush.msra.mxu0 0.0
    %90 = vmatpush.msra.mxu0 %v69
    %91 = vmatpush.msra.mxu0 %v67
    %92 = vmatpush.msra.mxu0 %v65
    %93 = vmatpush.msra.mxu0 %v63
    %94 = vmatpush.msra.mxu0 %v61
    %95 = vmatmul.f32.gmra.mxu0 %v77
    %v96 = vpop.f32.mrf.mxu0
    %v97 = vadd.f32 0.0, %v96
    %98 = vdwg.mxu0
    %99 = vmatpush.msra.mxu0 0.0
    %100 = vmatpush.msra.mxu0 0.0
    %101 = vmatpush.msra.mxu0 0.0
    %102 = vmatpush.msra.mxu0 0.0
    %103 = vmatpush.msra.mxu0 0.0
    %104 = vmatpush.msra.mxu0 0.0
    %105 = vmatpush.msra.mxu0 0.0
    %106 = vmatpush.msra.mxu0 0.0
    %107 = vmatpush.msra.mxu0 0.0
    %108 = vmatpush.msra.mxu0 0.0
    %109 = vmatpush.msra.mxu0 0.0
    %110 = vmatpush.msra.mxu0 %v70
    %111 = vmatpush.msra.mxu0 %v68
    %112 = vmatpush.msra.mxu0 %v66
    %113 = vmatpush.msra.mxu0 %v64
    %114 = vmatpush.msra.mxu0 %v62
    %115 = vmatmul.f32.gmra.mxu0 %v77
    %v116 = vpop.f32.mrf.mxu0
    %v117 = vadd.f32 0.0, %v116
    %118 = vdwg.mxu0
    %v119 = vrot.slane %v97, 4
    %v120 = vadd.f32 %v97, %v119
    %v121 = vrot.slane %v120, 2
    %v122 = vadd.f32 %v120, %v121
    %v123 = vrot.slane %v122, 1
    %v124 = vadd.f32 %v122, %v123
    %v125 = vrot.slane %v117, 4
    %v126 = vadd.f32 %v117, %v125
    %v127 = vrot.slane %v126, 2
    %v128 = vadd.f32 %v126, %v127
    %v129 = vrot.slane %v128, 1
    %v130 = vadd.f32 %v128, %v129
    %v131 = vmul.f32 %v97, %v97
    %v132 = vmul.f32 %v117, %v117
    %v133 = vrot.slane %v131, 4
    %v134 = vadd.f32 %v131, %v133
    %v135 = vrot.slane %v134, 2
    %v136 = vadd.f32 %v134, %v135
    %v137 = vrot.slane %v136, 1
    %v138 = vadd.f32 %v136, %v137
    %v139 = vrot.slane %v132, 4
    %v140 = vadd.f32 %v132, %v139
    %v141 = vrot.slane %v140, 2
    %v142 = vadd.f32 %v140, %v141
    %v143 = vrot.slane %v142, 1
    %v144 = vadd.f32 %v142, %v143
    %v145 = vmul.f32 %v124, 0.125
    %v146 = vmul.f32 %v130, 0.125
    %v147 = vmul.f32 %v138, 0.125
    %v148 = vmul.f32 %v144, 0.125
    %v149 = vmul.f32 %v145, %v145
    %v150 = vmul.f32 %v146, %v146
    %v151 = vsub.f32 %v147, %v149
    %v152 = vsub.f32 %v148, %v150
    %v153 = vadd.f32 %v151, 1e-05
    %v154 = vadd.f32 %v152, 1e-05
    %v155 = vrsqrt.pop %v153
    %v156 = vmul.f32 %v155, %v153
    %v157 = vmul.f32 %v156, %v155
    %v158 = vmul.f32 0.5, %v157
    %v159 = vsub.f32 1.5, %v158
    %v160 = vmul.f32 %v155, %v159
    %vm161 = vweird.f32 %v153
    %vm162 = vweird.f32 %v155
    %vm163 = vmor %vm161, %vm162
    %v164 = vsel %vm163, %v155, %v160
    %v165 = vrsqrt.pop %v154
    %v166 = vmul.f32 %v165, %v154
    %v167 = vmul.f32 %v166, %v165
    %v168 = vmul.f32 0.5, %v167
    %v169 = vsub.f32 1.5, %v168
    %v170 = vmul.f32 %v165, %v169
    %vm171 = vweird.f32 %v154
    %vm172 = vweird.f32 %v165
    %vm173 = vmor %vm171, %vm172
    %v174 = vsel %vm173, %v165, %v170
    %v177 = vrot.slane %v174, 7
    %vm178 = vcmask 1040384
    %v179 = vsel %vm178, %v164, %v177
    %v181 = vmul.f32 %v72, %v179
    %v183 = vperm.slane %v181, 0
    %v184 = vperm.slane %v181, 1
    %v187 = vmul.f32 %v145, %v183
    %v188 = vmul.f32 %v146, %v184
    %v191 = vrot.slane %v188, 7
    %v192 = vsel %vm178, %v187, %v191
    %v194 = vsub.f32 %v74, %v192
    %v195 = vmul.f32 %v97, %v183
    %v196 = vmul.f32 %v117, %v184
    %v198 = vperm.slane %v194, 0
    %v199 = vperm.slane %v194, 1
    %v202 = vadd.f32 %v195, %v198
    %v203 = vadd.f32 %v196, %v199
    %v204 = vmax.f32 %v202, 0.0
    %v205 = vmax.f32 %v203, 0.0
    %v206 = vld [vmem:[#allocation7] sm:$0xff]
    %v207 = vld [vmem:[#allocation7 + $0x8] sm:$0xff]
    %v208 = vld [vmem:[#allocation7 + $0x10] sm:$0xff]
    %v209 = vld [vmem:[#allocation7 + $0x18] sm:$0xff]
    %v210 = vld [vmem:[#allocation7 + $0x20] sm:$0xff]
    %v211 = vld [vmem:[#allocation7 + $0x28] sm:$0xff]
    %v212 = vld [vmem:[#allocation7 + $0x30] sm:$0xff]
    %v213 = vld [vmem:[#allocation7 + $0x38] sm:$0xff]
    %v214 = vld [vmem:[#allocation7 + $0x40] sm:$0xff]
    %v215 = vld [vmem:[#allocation7 + $0x48] sm:$0xff]
    %v216 = vld [vmem:[#allocation7 + $0x50] sm:$0xff]
    %v217 = vld [vmem:[#allocation7 + $0x58] sm:$0xff]
    %v218 = vld [vmem:[#allocation7 + $0x60] sm:$0xff]
    %v219 = vld [vmem:[#allocation7 + $0x68] sm:$0xff]
    %v220 = vld [vmem:[#allocation7 + $0x70] sm:$0xff]
    %v221 = vld [vmem:[#allocation7 + $0x78] sm:$0xff]
    %v222 = vld [vmem:[#allocation7 + $0x80] sm:$0xff]
    %v223 = vld [vmem:[#allocation7 + $0x88] sm:$0xff]
    %v224 = vld [vmem:[#allocation7 + $0x90] sm:$0xff]
    %v225 = vld [vmem:[#allocation7 + $0x98] sm:$0xff]
    %v226 = vld [vmem:[#allocation7 + $0xa0] sm:$0xff]
    %v227 = vld [vmem:[#allocation7 + $0xa8] sm:$0xff]
    %v228 = vld [vmem:[#allocation7 + $0xb0] sm:$0xff]
    %v229 = vld [vmem:[#allocation7 + $0xb8] sm:$0xff]
    %v230 = vld [vmem:[#allocation7 + $0xc0] sm:$0xff]
    %v231 = vld [vmem:[#allocation7 + $0xc8] sm:$0xff]
    %v232 = vld [vmem:[#allocation7 + $0xd0] sm:$0xff]
    %v233 = vld [vmem:[#allocation7 + $0xd8] sm:$0xff]
    %v234 = vld [vmem:[#allocation7 + $0xe0] sm:$0xff]
    %v235 = vld [vmem:[#allocation7 + $0xe8] sm:$0xff]
    %v236 = vld [vmem:[#allocation7 + $0xf0] sm:$0xff]
    %v237 = vld [vmem:[#allocation7 + $0xf8] sm:$0xff]
    %v238 = vld [vmem:[#allocation7 + $0x100] sm:$0x1]
    %v239 = vld [vmem:[#allocation7 + $0x101] sm:$0x1]
    %240 = vmatpush.msra.mxu0 %v221
    %241 = vmatpush.msra.mxu0 %v220
    %242 = vmatpush.msra.mxu0 %v219
    %243 = vmatpush.msra.mxu0 %v218
    %244 = vmatpush.msra.mxu0 %v217
    %245 = vmatpush.msra.mxu0 %v216
    %246 = vmatpush.msra.mxu0 %v215
    %247 = vmatpush.msra.mxu0 %v214
    %248 = vmatpush.msra.mxu0 %v213
    %249 = vmatpush.msra.mxu0 %v212
    %250 = vmatpush.msra.mxu0 %v211
    %251 = vmatpush.msra.mxu0 %v210
    %252 = vmatpush.msra.mxu0 %v209
    %253 = vmatpush.msra.mxu0 %v208
    %254 = vmatpush.msra.mxu0 %v207
    %255 = vmatpush.msra.mxu0 %v206
    %256 = vmatmul.f32.gmra.mxu0 %v204
    %v257 = vpop.f32.mrf.mxu0
    %v258 = vadd.f32 0.0, %v257
    %259 = vdwg.mxu0
    %260 = vmatpush.msra.mxu0 %v237
    %261 = vmatpush.msra.mxu0 %v236
    %262 = vmatpush.msra.mxu0 %v235
    %263 = vmatpush.msra.mxu0 %v234
    %264 = vmatpush.msra.mxu0 %v233
    %265 = vmatpush.msra.mxu0 %v232
    %266 = vmatpush.msra.mxu0 %v231
    %267 = vmatpush.msra.mxu0 %v230
    %268 = vmatpush.msra.mxu0 %v229
    %269 = vmatpush.msra.mxu0 %v228
    %270 = vmatpush.msra.mxu0 %v227
    %271 = vmatpush.msra.mxu0 %v226
    %272 = vmatpush.msra.mxu0 %v225
    %273 = vmatpush.msra.mxu0 %v224
    %274 = vmatpush.msra.mxu0 %v223
    %275 = vmatpush.msra.mxu0 %v222
    %276 = vmatmul.f32.gmra.mxu0 %v205
    %v277 = vpop.f32.mrf.mxu0
    %v278 = vadd.f32 %v258, %v277
    %279 = vdwg.mxu0
    %v280 = vrot.slane %v278, 4
    %v281 = vadd.f32 %v278, %v280
    %v282 = vrot.slane %v281, 2
    %v283 = vadd.f32 %v281, %v282
    %v284 = vrot.slane %v283, 1
    %v285 = vadd.f32 %v283, %v284
    %v286 = vmul.f32 %v278, %v278
    %v287 = vrot.slane %v286, 4
    %v288 = vadd.f32 %v286, %v287
    %v289 = vrot.slane %v288, 2
    %v290 = vadd.f32 %v288, %v289
    %v291 = vrot.slane %v290, 1
    %v292 = vadd.f32 %v290, %v291
    %v293 = vmul.f32 %v285, 0.125
    %v294 = vmul.f32 %v292, 0.125
    %v295 = vmul.f32 %v293, %v293
    %v296 = vsub.f32 %v294, %v295
    %v297 = vadd.f32 %v296, 1e-05
    %v298 = vrsqrt.pop %v297
    %v299 = vmul.f32 %v298, %v297
    %v300 = vmul.f32 %v299, %v298
    %v301 = vmul.f32 0.5, %v300
    %v302 = vsub.f32 1.5, %v301
    %v303 = vmul.f32 %v298, %v302
    %vm304 = vweird.f32 %v297
    %vm305 = vweird.f32 %v298
    %vm306 = vmor %vm304, %vm305
    %v307 = vsel %vm306, %v298, %v303
    %v308 = vmul.f32 %v238, %v307
    %v309 = vmul.f32 %v293, %v308
    %v310 = vsub.f32 %v239, %v309
    %v311 = vperm.slane %v308, 0
    %v312 = vmul.f32 %v278, %v311
    %v313 = vperm.slane %v310, 0
    %v314 = vadd.f32 %v312, %v313
    %v315 = vmax.f32 %v314, 0.0
    %v316 = vld [vmem:[#allocation7 + $0x108] sm:$0xff]
    %v317 = vld [vmem:[#allocation7 + $0x110] sm:$0xff]
    %v318 = vld [vmem:[#allocation7 + $0x118] sm:$0xff]
    %v319 = vld [vmem:[#allocation7 + $0x120] sm:$0xff]
    %v320 = vld [vmem:[#allocation7 + $0x128] sm:$0xff]
    %v321 = vld [vmem:[#allocation7 + $0x130] sm:$0xff]
    %v322 = vld [vmem:[#allocation7 + $0x138] sm:$0xff]
    %v323 = vld [vmem:[#allocation7 + $0x140] sm:$0xff]
    %v324 = vld [vmem:[#allocation7 + $0x148] sm:$0xff]
    %v325 = vld [vmem:[#allocation7 + $0x150] sm:$0xff]
    %v326 = vld [vmem:[#allocation7 + $0x158] sm:$0xff]
    %v327 = vld [vmem:[#allocation7 + $0x160] sm:$0xff]
    %v328 = vld [vmem:[#allocation7 + $0x168] sm:$0xff]
    %v329 = vld [vmem:[#allocation7 + $0x170] sm:$0xff]
    %v330 = vld [vmem:[#allocation7 + $0x178] sm:$0xff]
    %v331 = vld [vmem:[#allocation7 + $0x180] sm:$0xff]
    %v332 = vld [vmem:[#allocation7 + $0x188] sm:$0x1]
    %v333 = vperm.slane %v332, 0
    %334 = vmatpush.msra.mxu0 %v331
    %335 = vmatpush.msra.mxu0 %v330
    %336 = vmatpush.msra.mxu0 %v329
    %337 = vmatpush.msra.mxu0 %v328
    %338 = vmatpush.msra.mxu0 %v327
    %339 = vmatpush.msra.mxu0 %v326
    %340 = vmatpush.msra.mxu0 %v325
    %341 = vmatpush.msra.mxu0 %v324
    %342 = vmatpush.msra.mxu0 %v323
    %343 = vmatpush.msra.mxu0 %v322
    %344 = vmatpush.msra.mxu0 %v321
    %345 = vmatpush.msra.mxu0 %v320
    %346 = vmatpush.msra.mxu0 %v319
    %347 = vmatpush.msra.mxu0 %v318
    %348 = vmatpush.msra.mxu0 %v317
    %349 = vmatpush.msra.mxu0 %v316
    %350 = vmatmul.f32.gmra.mxu0 %v315
    %v351 = vpop.f32.mrf.mxu0
    %v352 = vadd.f32 %v333, %v351
    %353 = vdwg.mxu0
    %354 = vst [vmem:[#allocation8] sm:$0xff] %v352
    // Predicated region
    $region26: #{tpu_custom_call.1} parent=1 // pred_check
      _
    $region27: #{tpu_custom_call.1} parent=1 // pred_check_branch
      %356 = sbr.rel (0) target = $region29
    $region28: #{tpu_custom_call.1} parent=1 // pred_region
      %358 = vsyncadd [#allocation4], 0
      %s360 = sshll.u32 [#allocation8], 4
      %s361 = int_to_ptr.vmem [resolvable:$true] %s360
      %s362 = sshll.u32 %s3, 4
      %s363 = int_to_ptr.hbm [resolvable:$true] %s362
      %365 = dma.vmem_to_hbm [thread:$0]  %s361, 128, %s363, [#allocation4]
    $region29: #{tpu_custom_call.1} parent=1 // pred_fallthru
      _
    // Predicated region
    $region30: #{tpu_custom_call.1} parent=1 // pred_check
      _
    $region31: #{tpu_custom_call.1} parent=1 // pred_check_branch
      %367 = sbr.rel (0) target = $region33
    $region32: #{tpu_custom_call.1} parent=1 // pred_region
      %369 = dma.done [#allocation4], 128
    $region33: #{tpu_custom_call.1} parent=1 // pred_fallthru
      _
    %370 = vsyncpa [#allocation3], 1
    %371 = vsyncpa [#allocation6], 1
    %372 = vsyncpa [#allocation4], 1

</llo_original>
